<compile_context>
chip_gen: v6e
topology: v6e:2x2x1
jax: 0.10.0
libtpu: 0.0.40
codegen_flags: <defaults>
</compile_context>

<pallas_src>
import jax
import jax.numpy as jnp
from jax.experimental import pallas as pl
from jax.experimental.pallas import tpu as pltpu


# ----------------------------------------------------------------------------
# Tiling helpers
# ----------------------------------------------------------------------------
def _round_up(x, m):
    return ((x + m - 1) // m) * m


def _divisor_tile(dim, cap, mult):
    """Largest t dividing `dim` with t <= cap and (t % mult == 0 or t == dim)."""
    cap = max(1, min(cap, dim))
    for t in range(cap, 0, -1):
        if dim % t == 0 and (t % mult == 0 or t == dim):
            return t
    # No aligned divisor <= cap exists; fall back to the full dimension
    # (allowed by the (8,128) rule).  A cdiv grid + masked remainder would be
    # needed to tile such a dim; not required for typical image sizes.
    return dim


def _pick_tiles(B, D, Kp, budget_bytes):
    """Pick (tb, td) and report the per-step VMEM footprint."""
    # v7x megacore: aim for >= 2 blocks along the parallel B axis when B allows.
    tb_cap = 512 if B < 16 else min(512, B // 2)
    tb = _divisor_tile(B, tb_cap, 8)
    td = _divisor_tile(D, 2048, 128)

    def footprint(tb_, td_):
        x_tile = 2 * tb_ * td_ * 4      # double-buffered f32 X tile
        w_tile = 2 * td_ * Kp * 2       # double-buffered bf16 W tile
        acc = 2 * tb_ * Kp * 4          # resident f32 accumulator (out block)
        return x_tile + w_tile + acc

    # Shrink td first (keeps the parallel B axis wide), then tb.
    while footprint(tb, td) > budget_bytes and td > 128:
        new_td = _divisor_tile(D, td // 2, 128)
        if new_td >= td:
            break
        td = new_td
    while footprint(tb, td) > budget_bytes and tb > 8:
        new_tb = _divisor_tile(B, tb // 2, 8)
        if new_tb >= tb:
            break
        tb = new_tb
    return tb, td, footprint(tb, td)


# ----------------------------------------------------------------------------
# Kernel A: logits_all = X @ W   (f32 X cast to bf16 in-kernel, f32 accumulate)
# ----------------------------------------------------------------------------
def logits_kernel(x_ref, w_ref, out_ref):
    # x_ref: (tb, td) f32    w_ref: (td, Kp) bf16    out_ref: (tb, Kp) f32
    # Output block index is constant along the D (reduction) axis, so the
    # accumulator stays resident in VMEM across D steps.
    @pl.when(pl.program_id(1) == 0)
    def _init():
        out_ref[...] = jnp.zeros_like(out_ref)

    # In-kernel bf16 cast of the X tile: avoids a wrapper-side bf16 copy of the
    # dominant (B, D) tensor (the kernel is HBM-bound, the cast hides under DMA).
    out_ref[...] += jnp.dot(x_ref[...].astype(jnp.bfloat16), w_ref[...],
                            preferred_element_type=jnp.float32)


# ----------------------------------------------------------------------------
# Kernel B: epilogue on tiny (B, Kp) tensors — logit-space mixup + cross entropy
# ----------------------------------------------------------------------------
def make_mixup_ce_kernel(num_classes, batch):
    def mixup_ce_kernel(beta_ref, logits_ref, shuf_ref, bias_ref, m_ref, loss_ref):
        # beta_ref: (1,1) f32 SMEM       logits/shuf/m: (B, Kp) f32 VMEM
        # bias_ref: (1, Kp) f32 VMEM     loss_ref: (1,1) f32 SMEM
        beta = beta_ref[0, 0]

        # mixup in logit space (exact for an affine net), bias hoisted out of
        # the D loop of kernel A.
        mixed = (beta * logits_ref[...] + (1.0 - beta) * shuf_ref[...]
                 + bias_ref[...])

        # mask zero-padded class columns (K..Kp) out of the log-sum-exp
        col = jax.lax.broadcasted_iota(jnp.int32, mixed.shape, 1)
        mixed = jnp.where(col < num_classes, mixed, -1e30)

        mx = jnp.max(mixed, axis=-1, keepdims=True)
        lse = mx + jnp.log(jnp.sum(jnp.exp(mixed - mx), axis=-1, keepdims=True))
        nll = lse - mixed                                    # -log softmax
        # both CE terms fused: m = beta*onehot(t) + (1-beta)*onehot(t[index])
        # (per-row weights sum to 1, pad columns of m are zero).
        loss_ref[0, 0] = jnp.sum(nll * m_ref[...]) * (1.0 / batch)

    return mixup_ce_kernel


# ----------------------------------------------------------------------------
# Wrapper
# ----------------------------------------------------------------------------
def mixup_criterion_forward(image, target, index, beta_val, w, b):
    """Pallas implementation of Mixup_Criterion.forward with a linear net."""
    B = image.shape[0]
    D, K = w.shape
    Kp = _round_up(K, 128)          # lane-dense logits / unmasked stores

    # X stays f32 — no bf16 materialization of the dominant tensor.
    x2d = image.reshape(B, -1).astype(jnp.float32)
    assert x2d.shape[1] == D

    # Tiny O(D*Kp) / O(B*Kp) wrapper-side constructions (no (B, D) duplicates).
    w_bf = jnp.pad(w.astype(jnp.bfloat16), ((0, 0), (0, Kp - K)))
    bias = jnp.pad(jnp.reshape(b, (1, K)).astype(jnp.float32),
                   ((0, 0), (0, Kp - K)))
    beta_s = jnp.asarray(beta_val, jnp.float32)
    m = (beta_s * jax.nn.one_hot(target, Kp, dtype=jnp.float32)
         + (1.0 - beta_s) * jax.nn.one_hot(target[index], Kp, dtype=jnp.float32))

    # Tiling: B parallel (feeds v7x's 2 TCs when B >= 16), D is the reduction.
    budget = 24 * 1024 * 1024
    tb, td, foot = _pick_tiles(B, D, Kp, budget)
    vmem_limit = int(min(48 * 1024 * 1024,
                         max(foot + 4 * 1024 * 1024, 16 * 1024 * 1024)))

    logits = pl.pallas_call(
        logits_kernel,
        out_shape=jax.ShapeDtypeStruct((B, Kp), jnp.float32),
        grid_spec=pltpu.PrefetchScalarGridSpec(
            num_scalar_prefetch=0,
            grid=(B // tb, D // td),
            in_specs=[
                pl.BlockSpec((tb, td), lambda i, k: (i, k)),   # f32 image tile
                pl.BlockSpec((td, Kp), lambda i, k: (k, 0)),   # bf16 weight tile
            ],
            out_specs=pl.BlockSpec((tb, Kp), lambda i, k: (i, 0)),
        ),
        compiler_params=pltpu.CompilerParams(
            dimension_semantics=("parallel", "arbitrary"),
            vmem_limit_bytes=vmem_limit,
        ),
    )(x2d, w_bf)

    # Tiny O(B*Kp) row permutation of the logits; replaces the previous O(B^2)
    # permutation-as-matmul mix matrix (which would exceed v7x VMEM at large B).
    logits_shuf = jnp.take(logits, index, axis=0)

    loss = pl.pallas_call(
        make_mixup_ce_kernel(K, B),
        out_shape=jax.ShapeDtypeStruct((1, 1), jnp.float32),
        in_specs=[
            pl.BlockSpec(memory_space=pltpu.MemorySpace.SMEM),   # beta (1,1)
            pl.BlockSpec(memory_space=pltpu.MemorySpace.VMEM),   # logits (B,Kp)
            pl.BlockSpec(memory_space=pltpu.MemorySpace.VMEM),   # shuffled logits
            pl.BlockSpec(memory_space=pltpu.MemorySpace.VMEM),   # bias (1,Kp)
            pl.BlockSpec(memory_space=pltpu.MemorySpace.VMEM),   # m (B,Kp)
        ],
        out_specs=pl.BlockSpec(memory_space=pltpu.MemorySpace.SMEM),
    )(beta_s.reshape(1, 1), logits, logits_shuf, bias, m)
    return loss[0, 0]


def _reference(image, target, index, beta_val, w, b):
    """Pure-JAX f32 reference of the same forward (mixing in image space)."""
    B = image.shape[0]
    img2d = image.reshape(B, -1).astype(jnp.float32)
    mixed = beta_val * img2d + (1.0 - beta_val) * img2d[index]
    logits = mixed @ w + b.reshape(1, -1)
    logp = jax.nn.log_softmax(logits, axis=-1)

    def ce(t):
        return -jnp.mean(jnp.take_along_axis(logp, t[:, None], axis=-1))

    return beta_val * ce(target) + (1.0 - beta_val) * ce(target[index])


if __name__ == "__main__":
    key = jax.random.PRNGKey(0)
    k_img, k_tgt, k_w, k_beta, k_perm = jax.random.split(key, 5)

    # small shapes consistent with an NCHW image classifier
    B, C, H, W = 8, 4, 16, 16
    K = 16                       # number of classes
    D = C * H * W                # 1024
    beta_param = 1.0             # Mixup_Criterion(beta=1.0, cls_criterion=CE)

    image = jax.random.normal(k_img, (B, C, H, W), dtype=jnp.float32)
    target = jax.random.randint(k_tgt, (B,), 0, K)

    # deterministic "net" parameters: flatten + linear (D -> K)
    w = jax.random.normal(k_w, (D, K), dtype=jnp.float32) * 0.02
    b = jnp.zeros((K,), dtype=jnp.float32)

    # randomness of get_mixup_data (deterministic via PRNGKey)
    # TODO(synk): np.random.beta / torch.randperm have no in-kernel equivalent;
    # they are sampled here with jax.random and fed in as data.
    beta_val = jax.random.beta(k_beta, beta_param, beta_param).astype(jnp.float32)
    index = jax.random.permutation(k_perm, B)

    forward = jax.jit(mixup_criterion_forward)
    loss = forward(image, target, index, beta_val, w, b)
    loss = jax.block_until_ready(loss)

    ref = _reference(image, target, index, beta_val, w, b)
    # bf16 MXU operands -> slightly looser tolerance than pure f32
    assert jnp.allclose(loss, ref, atol=2e-2, rtol=2e-2), (loss, ref)

    print("KERNEL_OK")
</pallas_src>

<mosaic_0001>
module attributes {stable_mosaic.version = 11 : i64} {
  func.func @logits_kernel(%arg0: i32, %arg1: i32, %arg2: memref<8x1024xf32, #tpu.memory_space<vmem>>, %arg3: memref<1024x128xbf16, #tpu.memory_space<vmem>>, %arg4: memref<8x128xf32, #tpu.memory_space<vmem>>) attributes {dimension_semantics = [#tpu.dimension_semantics<parallel>, #tpu.dimension_semantics<arbitrary>], iteration_bounds = array<i64: 1, 1>, scalar_prefetch = 0 : i64, scratch_operands = 0 : i64, tpu.core_type = #tpu.core_type<tc>, window_params = [{transform_indices = @transform_0, window_bounds = array<i64: 8, 1024>}, {transform_indices = @transform_1, window_bounds = array<i64: 1024, 128>}, {transform_indices = @transform_2, window_bounds = array<i64: 8, 128>}]} {
    %c0_i32 = arith.constant 0 : i32
    %0 = arith.cmpi eq, %arg1, %c0_i32 : i32
    %1 = arith.extui %0 : i1 to i32
    %c0_i32_0 = arith.constant 0 : i32
    %2 = arith.cmpi ne, %1, %c0_i32_0 : i32
    scf.if %2 {
      %cst_8 = arith.constant 0.000000e+00 : f32
      %10 = vector.broadcast %cst_8 : f32 to vector<8x128xf32>
      %c0_9 = arith.constant 0 : index
      %c0_10 = arith.constant 0 : index
      %11 = vector.load %arg4[%c0_9, %c0_10] : memref<8x128xf32, #tpu.memory_space<vmem>>, vector<8x128xf32>
      tpu.vector_store %arg4[%c0_9, %c0_10], %10 {strides = array<i32>} : memref<8x128xf32, #tpu.memory_space<vmem>>, vector<8x128xf32>,
    } else {
    }
    %c0 = arith.constant 0 : index
    %c0_1 = arith.constant 0 : index
    %3 = vector.load %arg4[%c0, %c0_1] : memref<8x128xf32, #tpu.memory_space<vmem>>, vector<8x128xf32>
    %c0_2 = arith.constant 0 : index
    %c0_3 = arith.constant 0 : index
    %4 = vector.load %arg2[%c0_2, %c0_3] : memref<8x1024xf32, #tpu.memory_space<vmem>>, vector<8x1024xf32>
    %5 = arith.truncf %4 : vector<8x1024xf32> to vector<8x1024xbf16>
    %c0_4 = arith.constant 0 : index
    %c0_5 = arith.constant 0 : index
    %6 = vector.load %arg3[%c0_4, %c0_5] : memref<1024x128xbf16, #tpu.memory_space<vmem>>, vector<1024x128xbf16>
    %cst = arith.constant dense<0.000000e+00> : vector<8x128xf32>
    %7 = tpu.matmul %5, %6, %cst {dimension_numbers = #tpu.dot_dimension_numbers<[1], [0], [0], [1], [0, 0, 1, 1], [], []>} : vector<8x1024xbf16>, vector<1024x128xbf16>, vector<8x128xf32> -> vector<8x128xf32>
    %8 = arith.addf %3, %7 : vector<8x128xf32>
    %c0_6 = arith.constant 0 : index
    %c0_7 = arith.constant 0 : index
    %9 = vector.load %arg4[%c0_6, %c0_7] : memref<8x128xf32, #tpu.memory_space<vmem>>, vector<8x128xf32>
    tpu.vector_store %arg4[%c0_6, %c0_7], %8 {strides = array<i32>} : memref<8x128xf32, #tpu.memory_space<vmem>>, vector<8x128xf32>,
    return
  }
  func.func @transform_0(%arg0: i32, %arg1: i32) -> (i32, i32) {
    %c0_i32 = arith.constant 0 : i32
    return %arg0, %arg1 : i32, i32
  }
  func.func @transform_1(%arg0: i32, %arg1: i32) -> (i32, i32) {
    %c0_i32 = arith.constant 0 : i32
    %c0_i32_0 = arith.constant 0 : i32
    return %arg1, %c0_i32 : i32, i32
  }
  func.func @transform_2(%arg0: i32, %arg1: i32) -> (i32, i32) {
    %c0_i32 = arith.constant 0 : i32
    %c0_i32_0 = arith.constant 0 : i32
    return %arg0, %c0_i32 : i32, i32
  }
}

module attributes {stable_mosaic.version = 11 : i64} {
  func.func @mixup_ce_kernel(%arg0: memref<1x1xf32, #tpu.memory_space<smem>>, %arg1: memref<8x128xf32, #tpu.memory_space<vmem>>, %arg2: memref<8x128xf32, #tpu.memory_space<vmem>>, %arg3: memref<1x128xf32, #tpu.memory_space<vmem>>, %arg4: memref<8x128xf32, #tpu.memory_space<vmem>>, %arg5: memref<1x1xf32, #tpu.memory_space<smem>>) attributes {dimension_semantics = [], scalar_prefetch = 0 : i64, scratch_operands = 0 : i64, tpu.core_type = #tpu.core_type<tc>} {
    %c0 = arith.constant 0 : index
    %c0_0 = arith.constant 0 : index
    %0 = memref.load %arg0[%c0, %c0_0] : memref<1x1xf32, #tpu.memory_space<smem>>
    %c0_1 = arith.constant 0 : index
    %c0_2 = arith.constant 0 : index
    %1 = vector.load %arg1[%c0_1, %c0_2] : memref<8x128xf32, #tpu.memory_space<vmem>>, vector<8x128xf32>
    %2 = vector.broadcast %0 : f32 to vector<8x128xf32>
    %3 = arith.mulf %2, %1 : vector<8x128xf32>
    %cst = arith.constant 1.000000e+00 : f32
    %4 = arith.subf %cst, %0 : f32
    %c0_3 = arith.constant 0 : index
    %c0_4 = arith.constant 0 : index
    %5 = vector.load %arg2[%c0_3, %c0_4] : memref<8x128xf32, #tpu.memory_space<vmem>>, vector<8x128xf32>
    %6 = vector.broadcast %4 : f32 to vector<8x128xf32>
    %7 = arith.mulf %6, %5 : vector<8x128xf32>
    %8 = arith.addf %3, %7 : vector<8x128xf32>
    %c0_5 = arith.constant 0 : index
    %c0_6 = arith.constant 0 : index
    %9 = vector.load %arg3[%c0_5, %c0_6] : memref<1x128xf32, #tpu.memory_space<vmem>>, vector<1x128xf32>
    %10 = vector.broadcast %9 : vector<1x128xf32> to vector<8x128xf32>
    %11 = arith.addf %8, %10 : vector<8x128xf32>
    %12 = tpu.iota {dimensions = array<i32: 1>} : vector<8x128xi32>
    %c16_i32 = arith.constant 16 : i32
    %13 = vector.broadcast %c16_i32 : i32 to vector<8x128xi32>
    %14 = arith.cmpi slt, %12, %13 : vector<8x128xi32>
    %cst_7 = arith.constant -1.000000e+30 : f32
    %15 = vector.broadcast %cst_7 : f32 to vector<8x128xf32>
    %16 = arith.select %14, %11, %15 : vector<8x128xi1>, vector<8x128xf32>
    %cst_8 = arith.constant dense<0xFF800000> : vector<8xf32>
    %17 = vector.multi_reduction <maximumf>, %16, %cst_8 [1] : vector<8x128xf32> to vector<8xf32>
    %18 = vector.shape_cast %17 : vector<8xf32> to vector<8x1xf32>
    %19 = vector.broadcast %18 : vector<8x1xf32> to vector<8x128xf32>
    %20 = arith.subf %16, %19 : vector<8x128xf32>
    %21 = math.exp %20 : vector<8x128xf32>
    %cst_9 = arith.constant dense<0.000000e+00> : vector<8xf32>
    %22 = vector.multi_reduction <add>, %21, %cst_9 [1] : vector<8x128xf32> to vector<8xf32>
    %23 = vector.shape_cast %22 : vector<8xf32> to vector<8x1xf32>
    %24 = math.log %23 : vector<8x1xf32>
    %25 = arith.addf %18, %24 : vector<8x1xf32>
    %26 = vector.broadcast %25 : vector<8x1xf32> to vector<8x128xf32>
    %27 = arith.subf %26, %16 : vector<8x128xf32>
    %c0_10 = arith.constant 0 : index
    %c0_11 = arith.constant 0 : index
    %28 = vector.load %arg4[%c0_10, %c0_11] : memref<8x128xf32, #tpu.memory_space<vmem>>, vector<8x128xf32>
    %29 = arith.mulf %27, %28 : vector<8x128xf32>
    %30 = vector.shape_cast %29 : vector<8x128xf32> to vector<1x8x128xf32>
    %cst_12 = arith.constant dense<0.000000e+00> : vector<1xf32>
    %31 = vector.multi_reduction <add>, %30, %cst_12 [1, 2] : vector<1x8x128xf32> to vector<1xf32>
    %32 = vector.shape_cast %31 : vector<1xf32> to vector<1x1x1xf32>
    %33 = vector.extract %32[0, 0, 0] : f32 from vector<1x1x1xf32>
    %cst_13 = arith.constant 1.250000e-01 : f32
    %34 = arith.mulf %33, %cst_13 : f32
    %c0_14 = arith.constant 0 : index
    %c0_15 = arith.constant 0 : index
    %35 = memref.load %arg5[%c0_14, %c0_15] : memref<1x1xf32, #tpu.memory_space<smem>>
    memref.store %34, %arg5[%c0_14, %c0_15] : memref<1x1xf32, #tpu.memory_space<smem>>
    return
  }
}

</mosaic_0001>

<llo_original>
// kernel: mixup_criterion_forward.3
$region0: #{mixup_criterion_forward.3}
  #allocation0 [shape = 'u32[]', space=smem, size = 0x4, offset = 0x4, fixed_abs, tag = 'smem constant byte address 0x4 - core index']
  #allocation1 [shape = 'u32[144,128]{1,0:T(1,128)}', space=vmem, size = 0x12000, scoped, tag = 'internal scratch']
  #allocation2 [shape = 'f32[1,1]{1,0:T(1,128)S(6)}', space=smem, size = 0x200, scoped, tag = 'scoped memory for mixup_criterion_forward.3']
  %s0 = inlined_call_operand.<no memory space> [shape: f32[1,1], index: 0, kind: input, shape index: {}]
  %s1 = inlined_call_operand.vmem [shape: f32[8,128], index: 1, kind: input, shape index: {}]
  %s2 = inlined_call_operand.vmem [shape: f32[8,128], index: 2, kind: input, shape index: {}]
  %s3 = inlined_call_operand.vmem [shape: f32[1,128], index: 3, kind: input, shape index: {}]
  %s4 = inlined_call_operand.vmem [shape: f32[8,128], index: 4, kind: input, shape index: {}]
  %s5 = inlined_call_operand.hbm [shape: f32[1,1], index: 5, kind: output, shape index: {}]
  %s6 = sld [smem:[#allocation0]]
  $region30: #{mixup_criterion_forward.3} parent=0
    _
  %s8 = ssub.s32 1, %s6
  %s9 = scalar_select 0, %s8, %s6
  %10 = sst [smem:[#allocation2]] %s0
  $region1: #{mixup_criterion_forward.3} parent=0
    #allocation3 [shape = 'u8[512]{0}', space=smem, size = 0x200, scoped, tag = 'output window, operand 0, single buffered']
    #allocation4 [shape = 's32[1]{0}', space=sflag, size = 0x4, scoped, tag = 'scoped memory for mixup_criterion_forward.3']
    %11 = vsyncpa [#allocation4], 0
    // Predicated region
    $region2: #{mixup_criterion_forward.3} parent=1 // pred_check
      _
    $region3: #{mixup_criterion_forward.3} parent=1 // pred_check_branch
      %13 = sbr.rel (0) target = $region5
    $region4: #{mixup_criterion_forward.3} parent=1 // pred_region
      _
    $region5: #{mixup_criterion_forward.3} parent=1 // pred_fallthru
      _
    // Predicated region
    $region6: #{mixup_criterion_forward.3} parent=1 // pred_check
      _
    $region7: #{mixup_criterion_forward.3} parent=1 // pred_check_branch
      %15 = sbr.rel (0) target = $region9
    $region8: #{mixup_criterion_forward.3} parent=1 // pred_region
      _
    $region9: #{mixup_criterion_forward.3} parent=1 // pred_fallthru
      _
    // Predicated region
    $region10: #{mixup_criterion_forward.3} parent=1 // pred_check
      _
    $region11: #{mixup_criterion_forward.3} parent=1 // pred_check_branch
      %17 = sbr.rel (0) target = $region13
    $region12: #{mixup_criterion_forward.3} parent=1 // pred_region
      _
    $region13: #{mixup_criterion_forward.3} parent=1 // pred_fallthru
      _
    // Predicated region
    $region14: #{mixup_criterion_forward.3} parent=1 // pred_check
      _
    $region15: #{mixup_criterion_forward.3} parent=1 // pred_check_branch
      %19 = sbr.rel (0) target = $region17
    $region16: #{mixup_criterion_forward.3} parent=1 // pred_region
      _
    $region17: #{mixup_criterion_forward.3} parent=1 // pred_fallthru
      _
    // Predicated region
    $region18: #{mixup_criterion_forward.3} parent=1 // pred_check
      _
    $region19: #{mixup_criterion_forward.3} parent=1 // pred_check_branch
      %21 = sbr.rel (0) target = $region21
    $region20: #{mixup_criterion_forward.3} parent=1 // pred_region
      _
    $region21: #{mixup_criterion_forward.3} parent=1 // pred_fallthru
      _
    %s22 = sld [smem:[#allocation2]]
    %v23 = vld [vmem:[%s1] sm:$0xff]
    %v24 = vstv %s22
    %v25 = vmul.f32 %v24, %v23
    %s26 = ssub.f32 1.0, %s22
    %v27 = vld [vmem:[%s2] sm:$0xff]
    %v28 = vstv %s26
    %v29 = vmul.f32 %v28, %v27
    %v30 = vadd.f32 %v25, %v29
    %v31 = vld [vmem:[%s3] sm:$0x1]
    %v33 = vlaneseq
    %v34 = vshrl.u32 %v33, 7
    %v35 = vsub.s32 0, %v34
    %v36 = vrot.slane %v31, %v35
    %v38 = vadd.f32 %v30, %v36
    %v39 = vlaneseq
    %v40 = vand.u32 %v39, 127
    %vm41 = vcmp.lt.s32.totalorder %v40, 16
    %v42 = vsel %vm41, %v38, -1e+30
    %43 = vmax.xlane.f32.xlu0 %v42
    %v44 = vpop.xlane.xlu0 %43
    %v45 = vsub.f32 %v42, %v44
    %v46 = vmul.f32 %v45, 1.442695
    %v47 = vpow.pop %v46
    %48 = vadd.xlane.f32.xlu0 %v47
    %v49 = vpop.xlane.xlu0 %48
    %v50 = vlog2.pop %v49
    %v51 = vmul.f32 %v50, 0.6931472
    %v52 = vadd.f32 %v44, %v51
    %v53 = vsub.f32 %v52, %v42
    %v54 = vld [vmem:[%s4] sm:$0xff]
    %v55 = vmul.f32 %v53, %v54
    %56 = vadd.xlane.f32.xlu0 %v55
    %v57 = vpop.xlane.xlu0 %56
    %v58 = vrot.slane %v57, 4
    %v59 = vadd.f32 %v57, %v58
    %v60 = vrot.slane %v59, 2
    %v61 = vadd.f32 %v59, %v60
    %v62 = vrot.slane %v61, 1
    %v63 = vadd.f32 %v61, %v62
    %s64 = vtos %v63
    %s65 = smul.f32 %s64, 0.125
    %s66 = scalar_lea.smem [#allocation3], 0
    %67 = sst [smem:[%s66]] %s65
    // Predicated region
    $region22: #{mixup_criterion_forward.3} parent=1 // pred_check
      _
    $region23: #{mixup_criterion_forward.3} parent=1 // pred_check_branch
      %69 = sbr.rel (0) target = $region25
    $region24: #{mixup_criterion_forward.3} parent=1 // pred_region
      %s71 = ssub.s32 16, 16
      %72 = vsyncadd [#allocation4], %s71
      %75 = dma.smem_to_hbm [#allocation3], 16, %s5, [#allocation4]
    $region25: #{mixup_criterion_forward.3} parent=1 // pred_fallthru
      _
    // Predicated region
    $region26: #{mixup_criterion_forward.3} parent=1 // pred_check
      _
    $region27: #{mixup_criterion_forward.3} parent=1 // pred_check_branch
      %77 = sbr.rel (0) target = $region29
    $region28: #{mixup_criterion_forward.3} parent=1 // pred_region
      %78 = dma.done [#allocation4], 16
    $region29: #{mixup_criterion_forward.3} parent=1 // pred_fallthru
      _
    %79 = sfence
    %80 = vsyncpa [#allocation4], 1

// kernel: mixup_criterion_forward.2
$region0: #{mixup_criterion_forward.2}
  #allocation0 [shape = 'u32[]', space=smem, size = 0x4, offset = 0x4, fixed_abs, tag = 'smem constant byte address 0x4 - core index']
  #allocation1 [shape = 'u32[144,128]{1,0:T(1,128)}', space=vmem, size = 0x12000, scoped, tag = 'internal scratch']
  %s0 = inlined_call_operand.vmem [shape: f32[8,1024], index: 0, kind: input, shape index: {}]
  %s1 = inlined_call_operand.vmem [shape: bf16[1024,128], index: 1, kind: input, shape index: {}]
  %s2 = inlined_call_operand.vmem [shape: f32[8,128], index: 2, kind: output, shape index: {}]
  %s3 = sld [smem:[#allocation0]]
  $region22: #{mixup_criterion_forward.2} parent=0
    _
  %s5 = ssub.s32 1, %s3
  %s6 = scalar_select 0, %s5, %s3
  // Predicated region
  $region2: #{mixup_criterion_forward.2} parent=0 // pred_check
    _
  $region3: #{mixup_criterion_forward.2} parent=0 // pred_check_branch
    %8 = sbr.rel (0) target = $region5
  $region4: #{mixup_criterion_forward.2} parent=0 // pred_region
    _
  $region5: #{mixup_criterion_forward.2} parent=0 // pred_fallthru
    _
  // Predicated region
  $region6: #{mixup_criterion_forward.2} parent=0 // pred_check
    _
  $region7: #{mixup_criterion_forward.2} parent=0 // pred_check_branch
    %10 = sbr.rel (0) target = $region9
  $region8: #{mixup_criterion_forward.2} parent=0 // pred_region
    _
  $region9: #{mixup_criterion_forward.2} parent=0 // pred_fallthru
    _
  %p12 = scmp.eq.s32.totalorder 0, 0
  // Predicated region
  $region10: #{mixup_criterion_forward.2} parent=0 // pred_check
    %p13 = pneg %p12
  $region11: #{mixup_criterion_forward.2} parent=0 // pred_check_branch
    %15 = sbr.rel (%p13) target = $region13
  $region12: #{mixup_criterion_forward.2} parent=0 // pred_region
    %16 = vst [vmem:[%s2] sm:$0xff] 0.0
  $region13: #{mixup_criterion_forward.2} parent=0 // pred_fallthru
    _
  %v17 = vld [vmem:[%s2] sm:$0xff]
  %v18 = vld [vmem:[%s0] sm:$0xff]
  %v19 = vld [vmem:[%s0 + $0x8] sm:$0xff]
  %v20 = vld [vmem:[%s0 + $0x10] sm:$0xff]
  %v21 = vld [vmem:[%s0 + $0x18] sm:$0xff]
  %v22 = vld [vmem:[%s0 + $0x20] sm:$0xff]
  %v23 = vld [vmem:[%s0 + $0x28] sm:$0xff]
  %v24 = vld [vmem:[%s0 + $0x30] sm:$0xff]
  %v25 = vld [vmem:[%s0 + $0x38] sm:$0xff]
  %v26 = vpack.c.bf16 %v18, %v18
  %v27 = vpack.c.bf16 %v19, %v19
  %v28 = vpack.c.bf16 %v20, %v20
  %v29 = vpack.c.bf16 %v21, %v21
  %v30 = vpack.c.bf16 %v22, %v22
  %v31 = vpack.c.bf16 %v23, %v23
  %v32 = vpack.c.bf16 %v24, %v24
  %v33 = vpack.c.bf16 %v25, %v25
  %v34 = vld [vmem:[%s1] sm:$0xf]
  %v35 = vld [vmem:[%s1 + $0x4] sm:$0xf]
  %v36 = vld [vmem:[%s1 + $0x8] sm:$0xf]
  %v37 = vld [vmem:[%s1 + $0xc] sm:$0xf]
  %v38 = vld [vmem:[%s1 + $0x10] sm:$0xf]
  %v39 = vld [vmem:[%s1 + $0x14] sm:$0xf]
  %v40 = vld [vmem:[%s1 + $0x18] sm:$0xf]
  %v41 = vld [vmem:[%s1 + $0x1c] sm:$0xf]
  %v42 = vld [vmem:[%s1 + $0x20] sm:$0xf]
  %v43 = vld [vmem:[%s1 + $0x24] sm:$0xf]
  %v44 = vld [vmem:[%s1 + $0x28] sm:$0xf]
  %v45 = vld [vmem:[%s1 + $0x2c] sm:$0xf]
  %v46 = vld [vmem:[%s1 + $0x30] sm:$0xf]
  %v47 = vld [vmem:[%s1 + $0x34] sm:$0xf]
  %v48 = vld [vmem:[%s1 + $0x38] sm:$0xf]
  %v49 = vld [vmem:[%s1 + $0x3c] sm:$0xf]
  %v50 = vld [vmem:[%s1 + $0x40] sm:$0xf]
  %v51 = vld [vmem:[%s1 + $0x44] sm:$0xf]
  %v52 = vld [vmem:[%s1 + $0x48] sm:$0xf]
  %v53 = vld [vmem:[%s1 + $0x4c] sm:$0xf]
  %v54 = vld [vmem:[%s1 + $0x50] sm:$0xf]
  %v55 = vld [vmem:[%s1 + $0x54] sm:$0xf]
  %v56 = vld [vmem:[%s1 + $0x58] sm:$0xf]
  %v57 = vld [vmem:[%s1 + $0x5c] sm:$0xf]
  %v58 = vld [vmem:[%s1 + $0x60] sm:$0xf]
  %v59 = vld [vmem:[%s1 + $0x64] sm:$0xf]
  %v60 = vld [vmem:[%s1 + $0x68] sm:$0xf]
  %v61 = vld [vmem:[%s1 + $0x6c] sm:$0xf]
  %v62 = vld [vmem:[%s1 + $0x70] sm:$0xf]
  %v63 = vld [vmem:[%s1 + $0x74] sm:$0xf]
  %v64 = vld [vmem:[%s1 + $0x78] sm:$0xf]
  %v65 = vld [vmem:[%s1 + $0x7c] sm:$0xf]
  %v66 = vld [vmem:[%s1 + $0x80] sm:$0xf]
  %v67 = vld [vmem:[%s1 + $0x84] sm:$0xf]
  %v68 = vld [vmem:[%s1 + $0x88] sm:$0xf]
  %v69 = vld [vmem:[%s1 + $0x8c] sm:$0xf]
  %v70 = vld [vmem:[%s1 + $0x90] sm:$0xf]
  %v71 = vld [vmem:[%s1 + $0x94] sm:$0xf]
  %v72 = vld [vmem:[%s1 + $0x98] sm:$0xf]
  %v73 = vld [vmem:[%s1 + $0x9c] sm:$0xf]
  %v74 = vld [vmem:[%s1 + $0xa0] sm:$0xf]
  %v75 = vld [vmem:[%s1 + $0xa4] sm:$0xf]
  %v76 = vld [vmem:[%s1 + $0xa8] sm:$0xf]
  %v77 = vld [vmem:[%s1 + $0xac] sm:$0xf]
  %v78 = vld [vmem:[%s1 + $0xb0] sm:$0xf]
  %v79 = vld [vmem:[%s1 + $0xb4] sm:$0xf]
  %v80 = vld [vmem:[%s1 + $0xb8] sm:$0xf]
  %v81 = vld [vmem:[%s1 + $0xbc] sm:$0xf]
  %v82 = vld [vmem:[%s1 + $0xc0] sm:$0xf]
  %v83 = vld [vmem:[%s1 + $0xc4] sm:$0xf]
  %v84 = vld [vmem:[%s1 + $0xc8] sm:$0xf]
  %v85 = vld [vmem:[%s1 + $0xcc] sm:$0xf]
  %v86 = vld [vmem:[%s1 + $0xd0] sm:$0xf]
  %v87 = vld [vmem:[%s1 + $0xd4] sm:$0xf]
  %v88 = vld [vmem:[%s1 + $0xd8] sm:$0xf]
  %v89 = vld [vmem:[%s1 + $0xdc] sm:$0xf]
  %v90 = vld [vmem:[%s1 + $0xe0] sm:$0xf]
  %v91 = vld [vmem:[%s1 + $0xe4] sm:$0xf]
  %v92 = vld [vmem:[%s1 + $0xe8] sm:$0xf]
  %v93 = vld [vmem:[%s1 + $0xec] sm:$0xf]
  %v94 = vld [vmem:[%s1 + $0xf0] sm:$0xf]
  %v95 = vld [vmem:[%s1 + $0xf4] sm:$0xf]
  %v96 = vld [vmem:[%s1 + $0xf8] sm:$0xf]
  %v97 = vld [vmem:[%s1 + $0xfc] sm:$0xf]
  %v98 = vld [vmem:[%s1 + $0x100] sm:$0xf]
  %v99 = vld [vmem:[%s1 + $0x104] sm:$0xf]
  %v100 = vld [vmem:[%s1 + $0x108] sm:$0xf]
  %v101 = vld [vmem:[%s1 + $0x10c] sm:$0xf]
  %v102 = vld [vmem:[%s1 + $0x110] sm:$0xf]
  %v103 = vld [vmem:[%s1 + $0x114] sm:$0xf]
  %v104 = vld [vmem:[%s1 + $0x118] sm:$0xf]
  %v105 = vld [vmem:[%s1 + $0x11c] sm:$0xf]
  %v106 = vld [vmem:[%s1 + $0x120] sm:$0xf]
  %v107 = vld [vmem:[%s1 + $0x124] sm:$0xf]
  %v108 = vld [vmem:[%s1 + $0x128] sm:$0xf]
  %v109 = vld [vmem:[%s1 + $0x12c] sm:$0xf]
  %v110 = vld [vmem:[%s1 + $0x130] sm:$0xf]
  %v111 = vld [vmem:[%s1 + $0x134] sm:$0xf]
  %v112 = vld [vmem:[%s1 + $0x138] sm:$0xf]
  %v113 = vld [vmem:[%s1 + $0x13c] sm:$0xf]
  %v114 = vld [vmem:[%s1 + $0x140] sm:$0xf]
  %v115 = vld [vmem:[%s1 + $0x144] sm:$0xf]
  %v116 = vld [vmem:[%s1 + $0x148] sm:$0xf]
  %v117 = vld [vmem:[%s1 + $0x14c] sm:$0xf]
  %v118 = vld [vmem:[%s1 + $0x150] sm:$0xf]
  %v119 = vld [vmem:[%s1 + $0x154] sm:$0xf]
  %v120 = vld [vmem:[%s1 + $0x158] sm:$0xf]
  %v121 = vld [vmem:[%s1 + $0x15c] sm:$0xf]
  %v122 = vld [vmem:[%s1 + $0x160] sm:$0xf]
  %v123 = vld [vmem:[%s1 + $0x164] sm:$0xf]
  %v124 = vld [vmem:[%s1 + $0x168] sm:$0xf]
  %v125 = vld [vmem:[%s1 + $0x16c] sm:$0xf]
  %v126 = vld [vmem:[%s1 + $0x170] sm:$0xf]
  %v127 = vld [vmem:[%s1 + $0x174] sm:$0xf]
  %v128 = vld [vmem:[%s1 + $0x178] sm:$0xf]
  %v129 = vld [vmem:[%s1 + $0x17c] sm:$0xf]
  %v130 = vld [vmem:[%s1 + $0x180] sm:$0xf]
  %v131 = vld [vmem:[%s1 + $0x184] sm:$0xf]
  %v132 = vld [vmem:[%s1 + $0x188] sm:$0xf]
  %v133 = vld [vmem:[%s1 + $0x18c] sm:$0xf]
  %v134 = vld [vmem:[%s1 + $0x190] sm:$0xf]
  %v135 = vld [vmem:[%s1 + $0x194] sm:$0xf]
  %v136 = vld [vmem:[%s1 + $0x198] sm:$0xf]
  %v137 = vld [vmem:[%s1 + $0x19c] sm:$0xf]
  %v138 = vld [vmem:[%s1 + $0x1a0] sm:$0xf]
  %v139 = vld [vmem:[%s1 + $0x1a4] sm:$0xf]
  %v140 = vld [vmem:[%s1 + $0x1a8] sm:$0xf]
  %v141 = vld [vmem:[%s1 + $0x1ac] sm:$0xf]
  %v142 = vld [vmem:[%s1 + $0x1b0] sm:$0xf]
  %v143 = vld [vmem:[%s1 + $0x1b4] sm:$0xf]
  %v144 = vld [vmem:[%s1 + $0x1b8] sm:$0xf]
  %v145 = vld [vmem:[%s1 + $0x1bc] sm:$0xf]
  %v146 = vld [vmem:[%s1 + $0x1c0] sm:$0xf]
  %v147 = vld [vmem:[%s1 + $0x1c4] sm:$0xf]
  %v148 = vld [vmem:[%s1 + $0x1c8] sm:$0xf]
  %v149 = vld [vmem:[%s1 + $0x1cc] sm:$0xf]
  %v150 = vld [vmem:[%s1 + $0x1d0] sm:$0xf]
  %v151 = vld [vmem:[%s1 + $0x1d4] sm:$0xf]
  %v152 = vld [vmem:[%s1 + $0x1d8] sm:$0xf]
  %v153 = vld [vmem:[%s1 + $0x1dc] sm:$0xf]
  %v154 = vld [vmem:[%s1 + $0x1e0] sm:$0xf]
  %v155 = vld [vmem:[%s1 + $0x1e4] sm:$0xf]
  %v156 = vld [vmem:[%s1 + $0x1e8] sm:$0xf]
  %v157 = vld [vmem:[%s1 + $0x1ec] sm:$0xf]
  %v158 = vld [vmem:[%s1 + $0x1f0] sm:$0xf]
  %v159 = vld [vmem:[%s1 + $0x1f4] sm:$0xf]
  %v160 = vld [vmem:[%s1 + $0x1f8] sm:$0xf]
  %v161 = vld [vmem:[%s1 + $0x1fc] sm:$0xf]
  %v290 = vunpack.c.l.b16 %v34
  %v291 = vunpack.c.l.b16 %v35
  %v292 = vunpack.c.l.b16 %v36
  %v293 = vunpack.c.l.b16 %v37
  %v294 = vunpack.c.l.b16 %v38
  %v295 = vunpack.c.l.b16 %v39
  %v296 = vunpack.c.l.b16 %v40
  %v297 = vunpack.c.l.b16 %v41
  %v298 = vunpack.c.l.b16 %v42
  %v299 = vunpack.c.l.b16 %v43
  %v300 = vunpack.c.l.b16 %v44
  %v301 = vunpack.c.l.b16 %v45
  %v302 = vunpack.c.l.b16 %v46
  %v303 = vunpack.c.l.b16 %v47
  %v304 = vunpack.c.l.b16 %v48
  %v305 = vunpack.c.l.b16 %v49
  %v306 = vunpack.c.l.b16 %v50
  %v307 = vunpack.c.l.b16 %v51
  %v308 = vunpack.c.l.b16 %v52
  %v309 = vunpack.c.l.b16 %v53
  %v310 = vunpack.c.l.b16 %v54
  %v311 = vunpack.c.l.b16 %v55
  %v312 = vunpack.c.l.b16 %v56
  %v313 = vunpack.c.l.b16 %v57
  %v314 = vunpack.c.l.b16 %v58
  %v315 = vunpack.c.l.b16 %v59
  %v316 = vunpack.c.l.b16 %v60
  %v317 = vunpack.c.l.b16 %v61
  %v318 = vunpack.c.l.b16 %v62
  %v319 = vunpack.c.l.b16 %v63
  %v320 = vunpack.c.l.b16 %v64
  %v321 = vunpack.c.l.b16 %v65
  %v322 = vunpack.c.l.b16 %v66
  %v323 = vunpack.c.l.b16 %v67
  %v324 = vunpack.c.l.b16 %v68
  %v325 = vunpack.c.l.b16 %v69
  %v326 = vunpack.c.l.b16 %v70
  %v327 = vunpack.c.l.b16 %v71
  %v328 = vunpack.c.l.b16 %v72
  %v329 = vunpack.c.l.b16 %v73
  %v330 = vunpack.c.l.b16 %v74
  %v331 = vunpack.c.l.b16 %v75
  %v332 = vunpack.c.l.b16 %v76
  %v333 = vunpack.c.l.b16 %v77
  %v334 = vunpack.c.l.b16 %v78
  %v335 = vunpack.c.l.b16 %v79
  %v336 = vunpack.c.l.b16 %v80
  %v337 = vunpack.c.l.b16 %v81
  %v338 = vunpack.c.l.b16 %v82
  %v339 = vunpack.c.l.b16 %v83
  %v340 = vunpack.c.l.b16 %v84
  %v341 = vunpack.c.l.b16 %v85
  %v342 = vunpack.c.l.b16 %v86
  %v343 = vunpack.c.l.b16 %v87
  %v344 = vunpack.c.l.b16 %v88
  %v345 = vunpack.c.l.b16 %v89
  %v346 = vunpack.c.l.b16 %v90
  %v347 = vunpack.c.l.b16 %v91
  %v348 = vunpack.c.l.b16 %v92
  %v349 = vunpack.c.l.b16 %v93
  %v350 = vunpack.c.l.b16 %v94
  %v351 = vunpack.c.l.b16 %v95
  %v352 = vunpack.c.l.b16 %v96
  %v353 = vunpack.c.l.b16 %v97
  %v354 = vunpack.c.l.b16 %v98
  %v355 = vunpack.c.l.b16 %v99
  %v356 = vunpack.c.l.b16 %v100
  %v357 = vunpack.c.l.b16 %v101
  %v358 = vunpack.c.l.b16 %v102
  %v359 = vunpack.c.l.b16 %v103
  %v360 = vunpack.c.l.b16 %v104
  %v361 = vunpack.c.l.b16 %v105
  %v362 = vunpack.c.l.b16 %v106
  %v363 = vunpack.c.l.b16 %v107
  %v364 = vunpack.c.l.b16 %v108
  %v365 = vunpack.c.l.b16 %v109
  %v366 = vunpack.c.l.b16 %v110
  %v367 = vunpack.c.l.b16 %v111
  %v368 = vunpack.c.l.b16 %v112
  %v369 = vunpack.c.l.b16 %v113
  %v370 = vunpack.c.l.b16 %v114
  %v371 = vunpack.c.l.b16 %v115
  %v372 = vunpack.c.l.b16 %v116
  %v373 = vunpack.c.l.b16 %v117
  %v374 = vunpack.c.l.b16 %v118
  %v375 = vunpack.c.l.b16 %v119
  %v376 = vunpack.c.l.b16 %v120
  %v377 = vunpack.c.l.b16 %v121
  %v378 = vunpack.c.l.b16 %v122
  %v379 = vunpack.c.l.b16 %v123
  %v380 = vunpack.c.l.b16 %v124
  %v381 = vunpack.c.l.b16 %v125
  %v382 = vunpack.c.l.b16 %v126
  %v383 = vunpack.c.l.b16 %v127
  %v384 = vunpack.c.l.b16 %v128
  %v385 = vunpack.c.l.b16 %v129
  %v386 = vunpack.c.l.b16 %v130
  %v387 = vunpack.c.l.b16 %v131
  %v388 = vunpack.c.l.b16 %v132
  %v389 = vunpack.c.l.b16 %v133
  %v390 = vunpack.c.l.b16 %v134
  %v391 = vunpack.c.l.b16 %v135
  %v392 = vunpack.c.l.b16 %v136
  %v393 = vunpack.c.l.b16 %v137
  %v394 = vunpack.c.l.b16 %v138
  %v395 = vunpack.c.l.b16 %v139
  %v396 = vunpack.c.l.b16 %v140
  %v397 = vunpack.c.l.b16 %v141
  %v398 = vunpack.c.l.b16 %v142
  %v399 = vunpack.c.l.b16 %v143
  %v400 = vunpack.c.l.b16 %v144
  %v401 = vunpack.c.l.b16 %v145
  %v402 = vunpack.c.l.b16 %v146
  %v403 = vunpack.c.l.b16 %v147
  %v404 = vunpack.c.l.b16 %v148
  %v405 = vunpack.c.l.b16 %v149
  %v406 = vunpack.c.l.b16 %v150
  %v407 = vunpack.c.l.b16 %v151
  %v408 = vunpack.c.l.b16 %v152
  %v409 = vunpack.c.l.b16 %v153
  %v410 = vunpack.c.l.b16 %v154
  %v411 = vunpack.c.l.b16 %v155
  %v412 = vunpack.c.l.b16 %v156
  %v413 = vunpack.c.l.b16 %v157
  %v414 = vunpack.c.l.b16 %v158
  %v415 = vunpack.c.l.b16 %v159
  %v416 = vunpack.c.l.b16 %v160
  %v417 = vunpack.c.l.b16 %v161
  %v418 = vpack.c.b16 %v291, %v290
  %v419 = vpack.c.b16 %v293, %v292
  %v420 = vpack.c.b16 %v295, %v294
  %v421 = vpack.c.b16 %v297, %v296
  %v422 = vpack.c.b16 %v299, %v298
  %v423 = vpack.c.b16 %v301, %v300
  %v424 = vpack.c.b16 %v303, %v302
  %v425 = vpack.c.b16 %v305, %v304
  %v426 = vpack.c.b16 %v307, %v306
  %v427 = vpack.c.b16 %v309, %v308
  %v428 = vpack.c.b16 %v311, %v310
  %v429 = vpack.c.b16 %v313, %v312
  %v430 = vpack.c.b16 %v315, %v314
  %v431 = vpack.c.b16 %v317, %v316
  %v432 = vpack.c.b16 %v319, %v318
  %v433 = vpack.c.b16 %v321, %v320
  %v434 = vpack.c.b16 %v323, %v322
  %v435 = vpack.c.b16 %v325, %v324
  %v436 = vpack.c.b16 %v327, %v326
  %v437 = vpack.c.b16 %v329, %v328
  %v438 = vpack.c.b16 %v331, %v330
  %v439 = vpack.c.b16 %v333, %v332
  %v440 = vpack.c.b16 %v335, %v334
  %v441 = vpack.c.b16 %v337, %v336
  %v442 = vpack.c.b16 %v339, %v338
  %v443 = vpack.c.b16 %v341, %v340
  %v444 = vpack.c.b16 %v343, %v342
  %v445 = vpack.c.b16 %v345, %v344
  %v446 = vpack.c.b16 %v347, %v346
  %v447 = vpack.c.b16 %v349, %v348
  %v448 = vpack.c.b16 %v351, %v350
  %v449 = vpack.c.b16 %v353, %v352
  %v450 = vpack.c.b16 %v355, %v354
  %v451 = vpack.c.b16 %v357, %v356
  %v452 = vpack.c.b16 %v359, %v358
  %v453 = vpack.c.b16 %v361, %v360
  %v454 = vpack.c.b16 %v363, %v362
  %v455 = vpack.c.b16 %v365, %v364
  %v456 = vpack.c.b16 %v367, %v366
  %v457 = vpack.c.b16 %v369, %v368
  %v458 = vpack.c.b16 %v371, %v370
  %v459 = vpack.c.b16 %v373, %v372
  %v460 = vpack.c.b16 %v375, %v374
  %v461 = vpack.c.b16 %v377, %v376
  %v462 = vpack.c.b16 %v379, %v378
  %v463 = vpack.c.b16 %v381, %v380
  %v464 = vpack.c.b16 %v383, %v382
  %v465 = vpack.c.b16 %v385, %v384
  %v466 = vpack.c.b16 %v387, %v386
  %v467 = vpack.c.b16 %v389, %v388
  %v468 = vpack.c.b16 %v391, %v390
  %v469 = vpack.c.b16 %v393, %v392
  %v470 = vpack.c.b16 %v395, %v394
  %v471 = vpack.c.b16 %v397, %v396
  %v472 = vpack.c.b16 %v399, %v398
  %v473 = vpack.c.b16 %v401, %v400
  %v474 = vpack.c.b16 %v403, %v402
  %v475 = vpack.c.b16 %v405, %v404
  %v476 = vpack.c.b16 %v407, %v406
  %v477 = vpack.c.b16 %v409, %v408
  %v478 = vpack.c.b16 %v411, %v410
  %v479 = vpack.c.b16 %v413, %v412
  %v480 = vpack.c.b16 %v415, %v414
  %v481 = vpack.c.b16 %v417, %v416
  %546 = vmatprep.subr.bf16.mxu0 0
  %547 = vmatpush1.bf16.msra.mxu0 %v425
  %548 = vmatprep.subr.bf16.mxu0 0
  %549 = vmatpush1.bf16.msra.mxu0 %v424
  %550 = vmatprep.subr.bf16.mxu0 0
  %551 = vmatpush1.bf16.msra.mxu0 %v423
  %552 = vmatprep.subr.bf16.mxu0 0
  %553 = vmatpush1.bf16.msra.mxu0 %v422
  %554 = vmatprep.subr.bf16.mxu0 0
  %555 = vmatpush1.bf16.msra.mxu0 %v421
  %556 = vmatprep.subr.bf16.mxu0 0
  %557 = vmatpush1.bf16.msra.mxu0 %v420
  %558 = vmatprep.subr.bf16.mxu0 0
  %559 = vmatpush1.bf16.msra.mxu0 %v419
  %560 = vmatprep.subr.bf16.mxu0 0
  %561 = vmatpush1.bf16.msra.mxu0 %v418
  %562 = vmatprep.subr.bf16.mxu0 0
  %563 = vmatpush2.bf16.msra.mxu0 %v433
  %564 = vmatprep.subr.bf16.mxu0 0
  %565 = vmatpush2.bf16.msra.mxu0 %v432
  %566 = vmatprep.subr.bf16.mxu0 0
  %567 = vmatpush2.bf16.msra.mxu0 %v431
  %568 = vmatprep.subr.bf16.mxu0 0
  %569 = vmatpush2.bf16.msra.mxu0 %v430
  %570 = vmatprep.subr.bf16.mxu0 0
  %571 = vmatpush2.bf16.msra.mxu0 %v429
  %572 = vmatprep.subr.bf16.mxu0 0
  %573 = vmatpush2.bf16.msra.mxu0 %v428
  %574 = vmatprep.subr.bf16.mxu0 0
  %575 = vmatpush2.bf16.msra.mxu0 %v427
  %576 = vmatprep.subr.bf16.mxu0 0
  %577 = vmatpush2.bf16.msra.mxu0 %v426
  %578 = vmatprep.mubr.bf16.mxu0 %v27
  %579 = vmatmul.mubr.bf16.gmra.mxu0 %v26
  %v580 = vpop.f32.mrf.mxu0
  %v581 = vadd.f32 0.0, %v580
  %v582 = vpop.f32.mrf.mxu0
  %v583 = vpop.f32.mrf.mxu0
  %v584 = vpop.f32.mrf.mxu0
  %585 = vdwg.mxu0
  %586 = vmatprep.subr.bf16.mxu0 0
  %587 = vmatpush1.bf16.msra.mxu0 %v441
  %588 = vmatprep.subr.bf16.mxu0 0
  %589 = vmatpush1.bf16.msra.mxu0 %v440
  %590 = vmatprep.subr.bf16.mxu0 0
  %591 = vmatpush1.bf16.msra.mxu0 %v439
  %592 = vmatprep.subr.bf16.mxu0 0
  %593 = vmatpush1.bf16.msra.mxu0 %v438
  %594 = vmatprep.subr.bf16.mxu0 0
  %595 = vmatpush1.bf16.msra.mxu0 %v437
  %596 = vmatprep.subr.bf16.mxu0 0
  %597 = vmatpush1.bf16.msra.mxu0 %v436
  %598 = vmatprep.subr.bf16.mxu0 0
  %599 = vmatpush1.bf16.msra.mxu0 %v435
  %600 = vmatprep.subr.bf16.mxu0 0
  %601 = vmatpush1.bf16.msra.mxu0 %v434
  %602 = vmatprep.subr.bf16.mxu0 0
  %603 = vmatpush2.bf16.msra.mxu0 %v449
  %604 = vmatprep.subr.bf16.mxu0 0
  %605 = vmatpush2.bf16.msra.mxu0 %v448
  %606 = vmatprep.subr.bf16.mxu0 0
  %607 = vmatpush2.bf16.msra.mxu0 %v447
  %608 = vmatprep.subr.bf16.mxu0 0
  %609 = vmatpush2.bf16.msra.mxu0 %v446
  %610 = vmatprep.subr.bf16.mxu0 0
  %611 = vmatpush2.bf16.msra.mxu0 %v445
  %612 = vmatprep.subr.bf16.mxu0 0
  %613 = vmatpush2.bf16.msra.mxu0 %v444
  %614 = vmatprep.subr.bf16.mxu0 0
  %615 = vmatpush2.bf16.msra.mxu0 %v443
  %616 = vmatprep.subr.bf16.mxu0 0
  %617 = vmatpush2.bf16.msra.mxu0 %v442
  %618 = vmatprep.mubr.bf16.mxu0 %v29
  %619 = vmatmul.mubr.bf16.gmra.mxu0 %v28
  %v620 = vpop.f32.mrf.mxu0
  %v621 = vadd.f32 %v581, %v620
  %v622 = vpop.f32.mrf.mxu0
  %v623 = vpop.f32.mrf.mxu0
  %v624 = vpop.f32.mrf.mxu0
  %625 = vdwg.mxu0
  %626 = vmatprep.subr.bf16.mxu0 0
  %627 = vmatpush1.bf16.msra.mxu0 %v457
  %628 = vmatprep.subr.bf16.mxu0 0
  %629 = vmatpush1.bf16.msra.mxu0 %v456
  %630 = vmatprep.subr.bf16.mxu0 0
  %631 = vmatpush1.bf16.msra.mxu0 %v455
  %632 = vmatprep.subr.bf16.mxu0 0
  %633 = vmatpush1.bf16.msra.mxu0 %v454
  %634 = vmatprep.subr.bf16.mxu0 0
  %635 = vmatpush1.bf16.msra.mxu0 %v453
  %636 = vmatprep.subr.bf16.mxu0 0
  %637 = vmatpush1.bf16.msra.mxu0 %v452
  %638 = vmatprep.subr.bf16.mxu0 0
  %639 = vmatpush1.bf16.msra.mxu0 %v451
  %640 = vmatprep.subr.bf16.mxu0 0
  %641 = vmatpush1.bf16.msra.mxu0 %v450
  %642 = vmatprep.subr.bf16.mxu0 0
  %643 = vmatpush2.bf16.msra.mxu0 %v465
  %644 = vmatprep.subr.bf16.mxu0 0
  %645 = vmatpush2.bf16.msra.mxu0 %v464
  %646 = vmatprep.subr.bf16.mxu0 0
  %647 = vmatpush2.bf16.msra.mxu0 %v463
  %648 = vmatprep.subr.bf16.mxu0 0
  %649 = vmatpush2.bf16.msra.mxu0 %v462
  %650 = vmatprep.subr.bf16.mxu0 0
  %651 = vmatpush2.bf16.msra.mxu0 %v461
  %652 = vmatprep.subr.bf16.mxu0 0
  %653 = vmatpush2.bf16.msra.mxu0 %v460
  %654 = vmatprep.subr.bf16.mxu0 0
  %655 = vmatpush2.bf16.msra.mxu0 %v459
  %656 = vmatprep.subr.bf16.mxu0 0
  %657 = vmatpush2.bf16.msra.mxu0 %v458
  %658 = vmatprep.mubr.bf16.mxu0 %v31
  %659 = vmatmul.mubr.bf16.gmra.mxu0 %v30
  %v660 = vpop.f32.mrf.mxu0
  %v661 = vadd.f32 %v621, %v660
  %v662 = vpop.f32.mrf.mxu0
  %v663 = vpop.f32.mrf.mxu0
  %v664 = vpop.f32.mrf.mxu0
  %665 = vdwg.mxu0
  %666 = vmatprep.subr.bf16.mxu0 0
  %667 = vmatpush1.bf16.msra.mxu0 %v473
  %668 = vmatprep.subr.bf16.mxu0 0
  %669 = vmatpush1.bf16.msra.mxu0 %v472
  %670 = vmatprep.subr.bf16.mxu0 0
  %671 = vmatpush1.bf16.msra.mxu0 %v471
  %672 = vmatprep.subr.bf16.mxu0 0
  %673 = vmatpush1.bf16.msra.mxu0 %v470
  %674 = vmatprep.subr.bf16.mxu0 0
  %675 = vmatpush1.bf16.msra.mxu0 %v469
  %676 = vmatprep.subr.bf16.mxu0 0
  %677 = vmatpush1.bf16.msra.mxu0 %v468
  %678 = vmatprep.subr.bf16.mxu0 0
  %679 = vmatpush1.bf16.msra.mxu0 %v467
  %680 = vmatprep.subr.bf16.mxu0 0
  %681 = vmatpush1.bf16.msra.mxu0 %v466
  %682 = vmatprep.subr.bf16.mxu0 0
  %683 = vmatpush2.bf16.msra.mxu0 %v481
  %684 = vmatprep.subr.bf16.mxu0 0
  %685 = vmatpush2.bf16.msra.mxu0 %v480
  %686 = vmatprep.subr.bf16.mxu0 0
  %687 = vmatpush2.bf16.msra.mxu0 %v479
  %688 = vmatprep.subr.bf16.mxu0 0
  %689 = vmatpush2.bf16.msra.mxu0 %v478
  %690 = vmatprep.subr.bf16.mxu0 0
  %691 = vmatpush2.bf16.msra.mxu0 %v477
  %692 = vmatprep.subr.bf16.mxu0 0
  %693 = vmatpush2.bf16.msra.mxu0 %v476
  %694 = vmatprep.subr.bf16.mxu0 0
  %695 = vmatpush2.bf16.msra.mxu0 %v475
  %696 = vmatprep.subr.bf16.mxu0 0
  %697 = vmatpush2.bf16.msra.mxu0 %v474
  %698 = vmatprep.mubr.bf16.mxu0 %v33
  %699 = vmatmul.mubr.bf16.gmra.mxu0 %v32
  %v700 = vpop.f32.mrf.mxu0
  %v701 = vadd.f32 %v661, %v700
  %v702 = vpop.f32.mrf.mxu0
  %v703 = vpop.f32.mrf.mxu0
  %v704 = vpop.f32.mrf.mxu0
  %705 = vdwg.mxu0
  %v706 = vadd.f32 %v17, %v701
  %707 = vst [vmem:[%s2] sm:$0xff] %v706
  // Predicated region
  $region14: #{mixup_criterion_forward.2} parent=0 // pred_check
    _
  $region15: #{mixup_criterion_forward.2} parent=0 // pred_check_branch
    %709 = sbr.rel (0) target = $region17
  $region16: #{mixup_criterion_forward.2} parent=0 // pred_region
    _
  $region17: #{mixup_criterion_forward.2} parent=0 // pred_fallthru
    _
  // Predicated region
  $region18: #{mixup_criterion_forward.2} parent=0 // pred_check
    _
  $region19: #{mixup_criterion_forward.2} parent=0 // pred_check_branch
    %711 = sbr.rel (0) target = $region21
  $region20: #{mixup_criterion_forward.2} parent=0 // pred_region
    _
  $region21: #{mixup_criterion_forward.2} parent=0 // pred_fallthru
    _

</llo_original>
